<compile_context>
chip_gen: v6e
topology: v6e:2x2x1
jax: 0.10.0
libtpu: 0.0.40
codegen_flags: <defaults>
</compile_context>

<pallas_src>
import functools
import math

import jax
import jax.numpy as jnp
from jax.experimental import pallas as pl
from jax.experimental.pallas import tpu as pltpu


def _round_up(x, m):
    return (x + m - 1) // m * m


def _pick_tile(dim, target, base=128):
    """Largest multiple of `base` that divides `dim` (a multiple of base) and is <= target."""
    t = max(base, (min(target, dim) // base) * base)
    while dim % t:
        t -= base
    return t


def _vmem_limit_bytes():
    """~3/4 of physical VMEM, clamped: ~48 MiB on v7x (64 MiB), 96 MiB on v5e/v6e (128 MiB)."""
    phys = 64 * 1024 * 1024
    try:
        phys = pltpu.get_tpu_info().vmem_capacity_bytes
    except Exception:
        pass
    return int(min(96 * 1024 * 1024, max(32 * 1024 * 1024, (phys * 3) // 4)))


# ---- kernel 1: hw = (h * src_norm) @ W   (computed once, lane-dense bf16 output) ----
def _linear_kernel(h_ref, w_ref, hw_ref):
    hw_ref[...] = jnp.dot(
        h_ref[...], w_ref[...], preferred_element_type=jnp.float32
    ).astype(hw_ref.dtype)


# ---- kernel 2a: out = relu((adj @ hw) * dst_norm + bias), hw streamed per k tile ----
def _aggregate_kernel_streamed(adj_ref, hw_ref, norm_ref, bias_ref, out_ref):
    k = pl.program_id(1)

    @pl.when(k == 0)
    def _():
        out_ref[...] = jnp.zeros_like(out_ref)

    # Output block index is (i, 0) for every k -> it stays VMEM-resident and acts
    # as the f32 accumulator (no separate scratch needed).
    out_ref[...] += jnp.dot(
        adj_ref[...], hw_ref[...], preferred_element_type=jnp.float32
    )

    # Epilogue only on the last reduction step (keeps VPU work off the k critical path).
    @pl.when(k == pl.num_programs(1) - 1)
    def _():
        out_ref[...] = jnp.maximum(out_ref[...] * norm_ref[...] + bias_ref[...], 0.0)


# ---- kernel 2b: same, but hw is a fully VMEM-resident slab sliced per k tile ----
def _aggregate_kernel_resident(adj_ref, hw_ref, norm_ref, bias_ref, out_ref, *, tk):
    k = pl.program_id(1)

    @pl.when(k == 0)
    def _():
        out_ref[...] = jnp.zeros_like(out_ref)

    start = pl.multiple_of(k * tk, 128)
    out_ref[...] += jnp.dot(
        adj_ref[...], hw_ref[pl.ds(start, tk), :], preferred_element_type=jnp.float32
    )

    @pl.when(k == pl.num_programs(1) - 1)
    def _():
        out_ref[...] = jnp.maximum(out_ref[...] * norm_ref[...] + bias_ref[...], 0.0)


def prepare_graph(adj, norm, *, tm=512, tk=1024, compute_dtype=jnp.bfloat16):
    """One-time (per-graph) pad + cast.  adj[dst, src] = 1.0 for edge src->dst; norm: (N, 1).

    Returns (adj_p, norm_p) with the node count padded up to a multiple of the target
    tile so the layer's tile picker never collapses to 128x128.
    """
    N = adj.shape[0]
    n128 = _round_up(N, 128)
    tm_c = min(tm, n128)
    tk_c = min(tk, n128)
    Np = _round_up(N, math.lcm(tm_c, tk_c))
    # 0/1 adjacency is exact in bf16; this cast is paid once per graph, not per layer.
    adj_p = jnp.zeros((Np, Np), compute_dtype).at[:N, :N].set(adj.astype(compute_dtype))
    norm_p = jnp.zeros((Np, 1), jnp.float32).at[:N, :].set(norm.astype(jnp.float32))
    return adj_p, norm_p


def gcn_layer(h, weight, bias, adj_p, norm_p, *,
              compute_dtype=jnp.bfloat16, tm=512, tk=1024, tm_lin=1024,
              hw_resident=None):
    """Hot-path layer.  adj_p / norm_p come from prepare_graph (pre-padded, bf16/f32)."""
    N, in_feats = h.shape
    out_feats = weight.shape[1]
    Np = adj_p.shape[0]

    Fp = _round_up(out_feats, 128)   # lane-dense, MXU-aligned output features
    Kp = _round_up(in_feats, 128)    # lane-dense h loads, deeper MXU contraction

    vmem_limit = _vmem_limit_bytes()

    # Effective tiles: divisors of the (pre-padded) node count.
    tm = _pick_tile(Np, tm)
    tk = _pick_tile(Np, tk)
    tm_lin = _pick_tile(Np, tm_lin)

    # hw slab fully VMEM-resident in stage 2 when it (double-buffered) comfortably fits.
    if hw_resident is None:
        hw_resident = (2 * Np * Fp * 2) <= (vmem_limit // 4)

    # When hw is resident, splitting the dst axis costs no extra HBM traffic, and
    # >=2 dst tiles lets both v7x TensorCores work via the "parallel" dimension.
    if hw_resident and Np >= 256 and Np // tm < 2:
        tm = _pick_tile(Np, Np // 2)

    # Fold the SOURCE-side norm into h (one fused mul): (h*norm)@W == (h@W)*norm.
    h_s = (h * norm_p[:N, :]).astype(compute_dtype)
    h_p = jnp.zeros((Np, Kp), compute_dtype).at[:N, :in_feats].set(h_s)
    w_p = jnp.zeros((Kp, Fp), compute_dtype).at[:in_feats, :out_feats].set(
        weight.astype(compute_dtype))
    bias_p = jnp.zeros((1, Fp), jnp.float32).at[:, :out_feats].set(
        bias.reshape(1, -1).astype(jnp.float32))

    # --- Stage 1: hw = (h*norm_src) @ W, row-tiled; W stays resident. ---
    hw = pl.pallas_call(
        _linear_kernel,
        out_shape=jax.ShapeDtypeStruct((Np, Fp), compute_dtype),
        grid_spec=pltpu.PrefetchScalarGridSpec(
            num_scalar_prefetch=0,
            grid=(Np // tm_lin,),
            in_specs=[
                pl.BlockSpec((tm_lin, Kp), lambda i: (i, 0)),
                pl.BlockSpec((Kp, Fp), lambda i: (0, 0)),
            ],
            out_specs=pl.BlockSpec((tm_lin, Fp), lambda i: (i, 0)),
        ),
        compiler_params=pltpu.CompilerParams(
            dimension_semantics=("parallel",),
            vmem_limit_bytes=vmem_limit,
        ),
    )(h_p, w_p)

    # --- Stage 2: tiled adj @ hw with f32 accumulation into the resident output block. ---
    if hw_resident:
        kernel = functools.partial(_aggregate_kernel_resident, tk=tk)
        hw_spec = pl.BlockSpec((Np, Fp), lambda i, k: (0, 0))   # constant index -> single DMA
    else:
        kernel = _aggregate_kernel_streamed
        hw_spec = pl.BlockSpec((tk, Fp), lambda i, k: (k, 0))

    out_p = pl.pallas_call(
        kernel,
        out_shape=jax.ShapeDtypeStruct((Np, Fp), jnp.float32),
        grid_spec=pltpu.PrefetchScalarGridSpec(
            num_scalar_prefetch=0,
            grid=(Np // tm, Np // tk),
            in_specs=[
                pl.BlockSpec((tm, tk), lambda i, k: (i, k)),   # adj tile (dst, src)
                hw_spec,                                       # messages
                pl.BlockSpec((tm, 1), lambda i, k: (i, 0)),    # dst norm
                pl.BlockSpec((1, Fp), lambda i, k: (0, 0)),    # bias
            ],
            out_specs=pl.BlockSpec((tm, Fp), lambda i, k: (i, 0)),
        ),
        compiler_params=pltpu.CompilerParams(
            dimension_semantics=("parallel", "arbitrary"),
            vmem_limit_bytes=vmem_limit,
        ),
    )(adj_p, hw, norm_p, bias_p)

    return out_p[:N, :out_feats]


def reference(h, weight, adj, norm, bias):
    hw = h @ weight
    agg = adj @ (hw * norm)
    return jnp.maximum(agg * norm + bias.reshape(1, -1), 0.0)


if __name__ == "__main__":
    key = jax.random.PRNGKey(0)

    def make_inputs(k, N, in_feats, out_feats):
        k_h, k_w, k_b, k_adj = jax.random.split(k, 4)
        h = jax.random.normal(k_h, (N, in_feats), dtype=jnp.float32)
        # reset_parameters(): uniform(-stdv, stdv), stdv = 1/sqrt(out_feats)
        stdv = 1.0 / math.sqrt(out_feats)
        weight = jax.random.uniform(k_w, (in_feats, out_feats),
                                    minval=-stdv, maxval=stdv, dtype=jnp.float32)
        bias = jax.random.uniform(k_b, (out_feats,),
                                  minval=-stdv, maxval=stdv, dtype=jnp.float32)
        adj = (jax.random.uniform(k_adj, (N, N), dtype=jnp.float32) > 0.5).astype(jnp.float32)
        adj = jnp.maximum(adj, jnp.eye(N, dtype=jnp.float32))   # self-loops -> deg >= 1
        deg = jnp.sum(adj, axis=1, keepdims=True)
        norm = 1.0 / jnp.sqrt(deg)
        return h, weight, adj, norm, bias

    gcn = jax.jit(gcn_layer,
                  static_argnames=("compute_dtype", "tm", "tk", "tm_lin", "hw_resident"))

    # Test 1: module-scale toy problem (single padded tile), default big-tile config.
    k1, k2 = jax.random.split(key)
    h, weight, adj, norm, bias = make_inputs(k1, 8, 32, 16)
    adj_p, norm_p = prepare_graph(adj, norm)                    # one-time per-graph pad/cast
    out = jax.block_until_ready(gcn(h, weight, bias, adj_p, norm_p))
    ref = reference(h, weight, adj, norm, bias)
    assert out.shape == ref.shape
    # bf16 MXU inputs -> loosened tolerance vs. pure-f32 reference.
    assert jnp.allclose(out, ref, atol=5e-2, rtol=5e-2), "mismatch vs reference (toy)"

    # Test 2: larger graph exercising the (dst-tile, reduction-tile) grid, the
    # resident-hw slab + in-kernel pl.ds slicing, accumulation phases and padding/slicing.
    h, weight, adj, norm, bias = make_inputs(k2, 300, 64, 48)
    adj_p, norm_p = prepare_graph(adj, norm, tm=128, tk=128)
    out = jax.block_until_ready(gcn(h, weight, bias, adj_p, norm_p, tm=128, tk=128))
    ref = reference(h, weight, adj, norm, bias)
    assert out.shape == ref.shape
    assert jnp.allclose(out, ref, atol=5e-2, rtol=5e-2), "mismatch vs reference (tiled)"

    # Test 3: same graph through the streamed-hw path (hw_resident=False).
    out2 = jax.block_until_ready(
        gcn(h, weight, bias, adj_p, norm_p, tm=128, tk=128, hw_resident=False))
    assert jnp.allclose(out2, ref, atol=5e-2, rtol=5e-2), "mismatch vs reference (streamed)"

    print("KERNEL_OK")
</pallas_src>

<mosaic_0001>
module attributes {stable_mosaic.version = 11 : i64} {
  func.func @_linear_kernel(%arg0: i32, %arg1: memref<128x128xbf16, #tpu.memory_space<vmem>>, %arg2: memref<128x128xbf16, #tpu.memory_space<vmem>>, %arg3: memref<128x128xbf16, #tpu.memory_space<vmem>>) attributes {dimension_semantics = [#tpu.dimension_semantics<parallel>], iteration_bounds = array<i64: 1>, scalar_prefetch = 0 : i64, scratch_operands = 0 : i64, tpu.core_type = #tpu.core_type<tc>, window_params = [{transform_indices = @transform_0, window_bounds = array<i64: 128, 128>}, {pipeline_mode = #tpu.pipeline_mode<synchronous>, transform_indices = @transform_1, window_bounds = array<i64: 128, 128>}, {transform_indices = @transform_2, window_bounds = array<i64: 128, 128>}]} {
    %c0 = arith.constant 0 : index
    %c0_0 = arith.constant 0 : index
    %0 = vector.load %arg1[%c0, %c0_0] : memref<128x128xbf16, #tpu.memory_space<vmem>>, vector<128x128xbf16>
    %c0_1 = arith.constant 0 : index
    %c0_2 = arith.constant 0 : index
    %1 = vector.load %arg2[%c0_1, %c0_2] : memref<128x128xbf16, #tpu.memory_space<vmem>>, vector<128x128xbf16>
    %cst = arith.constant dense<0.000000e+00> : vector<128x128xf32>
    %2 = tpu.matmul %0, %1, %cst {dimension_numbers = #tpu.dot_dimension_numbers<[1], [0], [0], [1], [0, 0, 1, 1], [], []>} : vector<128x128xbf16>, vector<128x128xbf16>, vector<128x128xf32> -> vector<128x128xf32>
    %3 = arith.truncf %2 : vector<128x128xf32> to vector<128x128xbf16>
    %c0_3 = arith.constant 0 : index
    %c0_4 = arith.constant 0 : index
    %4 = vector.load %arg3[%c0_3, %c0_4] : memref<128x128xbf16, #tpu.memory_space<vmem>>, vector<128x128xbf16>
    tpu.vector_store %arg3[%c0_3, %c0_4], %3 {strides = array<i32>} : memref<128x128xbf16, #tpu.memory_space<vmem>>, vector<128x128xbf16>,
    return
  }
  func.func @transform_0(%arg0: i32) -> (i32, i32) {
    %c0_i32 = arith.constant 0 : i32
    %c0_i32_0 = arith.constant 0 : i32
    return %arg0, %c0_i32 : i32, i32
  }
  func.func @transform_1(%arg0: i32) -> (i32, i32) {
    %c0_i32 = arith.constant 0 : i32
    %c0_i32_0 = arith.constant 0 : i32
    %c0_i32_1 = arith.constant 0 : i32
    return %c0_i32, %c0_i32_0 : i32, i32
  }
  func.func @transform_2(%arg0: i32) -> (i32, i32) {
    %c0_i32 = arith.constant 0 : i32
    %c0_i32_0 = arith.constant 0 : i32
    return %arg0, %c0_i32 : i32, i32
  }
}

module attributes {stable_mosaic.version = 11 : i64} {
  func.func @_aggregate_kernel_resident(%arg0: i32, %arg1: i32, %arg2: memref<128x128xbf16, #tpu.memory_space<vmem>>, %arg3: memref<128x128xbf16, #tpu.memory_space<vmem>>, %arg4: memref<128x1xf32, #tpu.memory_space<vmem>>, %arg5: memref<1x128xf32, #tpu.memory_space<vmem>>, %arg6: memref<128x128xf32, #tpu.memory_space<vmem>>) attributes {dimension_semantics = [#tpu.dimension_semantics<parallel>, #tpu.dimension_semantics<arbitrary>], iteration_bounds = array<i64: 1, 1>, scalar_prefetch = 0 : i64, scratch_operands = 0 : i64, tpu.core_type = #tpu.core_type<tc>, window_params = [{transform_indices = @transform_0, window_bounds = array<i64: 128, 128>}, {pipeline_mode = #tpu.pipeline_mode<synchronous>, transform_indices = @transform_1, window_bounds = array<i64: 128, 128>}, {transform_indices = @transform_2, window_bounds = array<i64: 128, 1>}, {pipeline_mode = #tpu.pipeline_mode<synchronous>, transform_indices = @transform_3, window_bounds = array<i64: 1, 128>}, {transform_indices = @transform_4, window_bounds = array<i64: 128, 128>}]} {
    %c0_i32 = arith.constant 0 : i32
    %0 = arith.cmpi eq, %arg1, %c0_i32 : i32
    %1 = arith.extui %0 : i1 to i32
    %c0_i32_0 = arith.constant 0 : i32
    %2 = arith.cmpi ne, %1, %c0_i32_0 : i32
    scf.if %2 {
      %cst_9 = arith.constant 0.000000e+00 : f32
      %15 = vector.broadcast %cst_9 : f32 to vector<128x128xf32>
      %c0_10 = arith.constant 0 : index
      %c0_11 = arith.constant 0 : index
      %16 = vector.load %arg6[%c0_10, %c0_11] : memref<128x128xf32, #tpu.memory_space<vmem>>, vector<128x128xf32>
      tpu.vector_store %arg6[%c0_10, %c0_11], %15 {strides = array<i32>} : memref<128x128xf32, #tpu.memory_space<vmem>>, vector<128x128xf32>,
    } else {
    }
    %c128_i32 = arith.constant 128 : i32
    %3 = arith.muli %arg1, %c128_i32 : i32
    %4 = tpu.assume_multiple %3, 128 : i32
    %c0 = arith.constant 0 : index
    %c0_1 = arith.constant 0 : index
    %5 = vector.load %arg6[%c0, %c0_1] : memref<128x128xf32, #tpu.memory_space<vmem>>, vector<128x128xf32>
    %c0_2 = arith.constant 0 : index
    %c0_3 = arith.constant 0 : index
    %6 = vector.load %arg2[%c0_2, %c0_3] : memref<128x128xbf16, #tpu.memory_space<vmem>>, vector<128x128xbf16>
    %7 = arith.index_cast %4 : i32 to index
    %c0_4 = arith.constant 0 : index
    %8 = vector.load %arg3[%7, %c0_4] : memref<128x128xbf16, #tpu.memory_space<vmem>>, vector<128x128xbf16>
    %cst = arith.constant dense<0.000000e+00> : vector<128x128xf32>
    %9 = tpu.matmul %6, %8, %cst {dimension_numbers = #tpu.dot_dimension_numbers<[1], [0], [0], [1], [0, 0, 1, 1], [], []>} : vector<128x128xbf16>, vector<128x128xbf16>, vector<128x128xf32> -> vector<128x128xf32>
    %10 = arith.addf %5, %9 : vector<128x128xf32>
    %c0_5 = arith.constant 0 : index
    %c0_6 = arith.constant 0 : index
    %11 = vector.load %arg6[%c0_5, %c0_6] : memref<128x128xf32, #tpu.memory_space<vmem>>, vector<128x128xf32>
    tpu.vector_store %arg6[%c0_5, %c0_6], %10 {strides = array<i32>} : memref<128x128xf32, #tpu.memory_space<vmem>>, vector<128x128xf32>,
    %c0_i32_7 = arith.constant 0 : i32
    %12 = arith.cmpi eq, %arg1, %c0_i32_7 : i32
    %13 = arith.extui %12 : i1 to i32
    %c0_i32_8 = arith.constant 0 : i32
    %14 = arith.cmpi ne, %13, %c0_i32_8 : i32
    scf.if %14 {
      %c0_9 = arith.constant 0 : index
      %c0_10 = arith.constant 0 : index
      %15 = vector.load %arg6[%c0_9, %c0_10] : memref<128x128xf32, #tpu.memory_space<vmem>>, vector<128x128xf32>
      %c0_11 = arith.constant 0 : index
      %c0_12 = arith.constant 0 : index
      %16 = vector.load %arg4[%c0_11, %c0_12] : memref<128x1xf32, #tpu.memory_space<vmem>>, vector<128x1xf32>
      %17 = vector.broadcast %16 : vector<128x1xf32> to vector<128x128xf32>
      %18 = arith.mulf %15, %17 : vector<128x128xf32>
      %c0_13 = arith.constant 0 : index
      %c0_14 = arith.constant 0 : index
      %19 = vector.load %arg5[%c0_13, %c0_14] : memref<1x128xf32, #tpu.memory_space<vmem>>, vector<1x128xf32>
      %20 = vector.broadcast %19 : vector<1x128xf32> to vector<128x128xf32>
      %21 = arith.addf %18, %20 : vector<128x128xf32>
      %cst_15 = arith.constant 0.000000e+00 : f32
      %22 = vector.broadcast %cst_15 : f32 to vector<128x128xf32>
      %23 = arith.maximumf %21, %22 : vector<128x128xf32>
      %c0_16 = arith.constant 0 : index
      %c0_17 = arith.constant 0 : index
      %24 = vector.load %arg6[%c0_16, %c0_17] : memref<128x128xf32, #tpu.memory_space<vmem>>, vector<128x128xf32>
      tpu.vector_store %arg6[%c0_16, %c0_17], %23 {strides = array<i32>} : memref<128x128xf32, #tpu.memory_space<vmem>>, vector<128x128xf32>,
    } else {
    }
    return
  }
  func.func @transform_0(%arg0: i32, %arg1: i32) -> (i32, i32) {
    %c0_i32 = arith.constant 0 : i32
    return %arg0, %arg1 : i32, i32
  }
  func.func @transform_1(%arg0: i32, %arg1: i32) -> (i32, i32) {
    %c0_i32 = arith.constant 0 : i32
    %c0_i32_0 = arith.constant 0 : i32
    %c0_i32_1 = arith.constant 0 : i32
    return %c0_i32, %c0_i32_0 : i32, i32
  }
  func.func @transform_2(%arg0: i32, %arg1: i32) -> (i32, i32) {
    %c0_i32 = arith.constant 0 : i32
    %c0_i32_0 = arith.constant 0 : i32
    return %arg0, %c0_i32 : i32, i32
  }
  func.func @transform_3(%arg0: i32, %arg1: i32) -> (i32, i32) {
    %c0_i32 = arith.constant 0 : i32
    %c0_i32_0 = arith.constant 0 : i32
    %c0_i32_1 = arith.constant 0 : i32
    return %c0_i32, %c0_i32_0 : i32, i32
  }
  func.func @transform_4(%arg0: i32, %arg1: i32) -> (i32, i32) {
    %c0_i32 = arith.constant 0 : i32
    %c0_i32_0 = arith.constant 0 : i32
    return %arg0, %c0_i32 : i32, i32
  }
}

</mosaic_0001>

<llo_original>
// kernel: gcn_layer.2
$region0: #{gcn_layer.2}
  #allocation0 [shape = 'u32[]', space=smem, size = 0x4, offset = 0x4, fixed_abs, tag = 'smem constant byte address 0x4 - core index']
  #allocation1 [shape = 'u32[144,128]{1,0:T(1,128)}', space=vmem, size = 0x12000, scoped, tag = 'internal scratch']
  %s0 = inlined_call_operand.vmem [shape: bf16[128,128], index: 0, kind: input, shape index: {}]
  %s1 = inlined_call_operand.vmem [shape: bf16[128,128], index: 1, kind: input, shape index: {}]
  %s2 = inlined_call_operand.vmem [shape: bf16[128,128], index: 2, kind: output, shape index: {}]
  %s3 = sld [smem:[#allocation0]]
  $region18: #{gcn_layer.2} parent=0
    _
  %s5 = ssub.s32 1, %s3
  %s6 = scalar_select 0, %s5, %s3
  // Predicated region
  $region2: #{gcn_layer.2} parent=0 // pred_check
    _
  $region3: #{gcn_layer.2} parent=0 // pred_check_branch
    %8 = sbr.rel (0) target = $region5
  $region4: #{gcn_layer.2} parent=0 // pred_region
    _
  $region5: #{gcn_layer.2} parent=0 // pred_fallthru
    _
  // Predicated region
  $region6: #{gcn_layer.2} parent=0 // pred_check
    _
  $region7: #{gcn_layer.2} parent=0 // pred_check_branch
    %10 = sbr.rel (0) target = $region9
  $region8: #{gcn_layer.2} parent=0 // pred_region
    _
  $region9: #{gcn_layer.2} parent=0 // pred_fallthru
    _
  %v12 = vld [vmem:[%s0] sm:$0xf]
  %v13 = vld [vmem:[%s0 + $0x4] sm:$0xf]
  %v14 = vld [vmem:[%s0 + $0x8] sm:$0xf]
  %v15 = vld [vmem:[%s0 + $0xc] sm:$0xf]
  %v16 = vld [vmem:[%s0 + $0x10] sm:$0xf]
  %v17 = vld [vmem:[%s0 + $0x14] sm:$0xf]
  %v18 = vld [vmem:[%s0 + $0x18] sm:$0xf]
  %v19 = vld [vmem:[%s0 + $0x1c] sm:$0xf]
  %v20 = vld [vmem:[%s0 + $0x20] sm:$0xf]
  %v21 = vld [vmem:[%s0 + $0x24] sm:$0xf]
  %v22 = vld [vmem:[%s0 + $0x28] sm:$0xf]
  %v23 = vld [vmem:[%s0 + $0x2c] sm:$0xf]
  %v24 = vld [vmem:[%s0 + $0x30] sm:$0xf]
  %v25 = vld [vmem:[%s0 + $0x34] sm:$0xf]
  %v26 = vld [vmem:[%s0 + $0x38] sm:$0xf]
  %v27 = vld [vmem:[%s0 + $0x3c] sm:$0xf]
  %v28 = vld [vmem:[%s1] sm:$0xf]
  %v29 = vld [vmem:[%s1 + $0x4] sm:$0xf]
  %v30 = vld [vmem:[%s1 + $0x8] sm:$0xf]
  %v31 = vld [vmem:[%s1 + $0xc] sm:$0xf]
  %v32 = vld [vmem:[%s1 + $0x10] sm:$0xf]
  %v33 = vld [vmem:[%s1 + $0x14] sm:$0xf]
  %v34 = vld [vmem:[%s1 + $0x18] sm:$0xf]
  %v35 = vld [vmem:[%s1 + $0x1c] sm:$0xf]
  %v36 = vld [vmem:[%s1 + $0x20] sm:$0xf]
  %v37 = vld [vmem:[%s1 + $0x24] sm:$0xf]
  %v38 = vld [vmem:[%s1 + $0x28] sm:$0xf]
  %v39 = vld [vmem:[%s1 + $0x2c] sm:$0xf]
  %v40 = vld [vmem:[%s1 + $0x30] sm:$0xf]
  %v41 = vld [vmem:[%s1 + $0x34] sm:$0xf]
  %v42 = vld [vmem:[%s1 + $0x38] sm:$0xf]
  %v43 = vld [vmem:[%s1 + $0x3c] sm:$0xf]
  %v60 = vunpack.c.l.b16 %v12
  %v61 = vunpack.c.l.b16 %v13
  %v62 = vunpack.c.l.b16 %v14
  %v63 = vunpack.c.l.b16 %v15
  %v64 = vunpack.c.l.b16 %v16
  %v65 = vunpack.c.l.b16 %v17
  %v66 = vunpack.c.l.b16 %v18
  %v67 = vunpack.c.l.b16 %v19
  %v68 = vunpack.c.l.b16 %v20
  %v69 = vunpack.c.l.b16 %v21
  %v70 = vunpack.c.l.b16 %v22
  %v71 = vunpack.c.l.b16 %v23
  %v72 = vunpack.c.l.b16 %v24
  %v73 = vunpack.c.l.b16 %v25
  %v74 = vunpack.c.l.b16 %v26
  %v75 = vunpack.c.l.b16 %v27
  %v76 = vpack.c.b16 %v61, %v60
  %v77 = vpack.c.b16 %v63, %v62
  %v78 = vpack.c.b16 %v65, %v64
  %v79 = vpack.c.b16 %v67, %v66
  %v80 = vpack.c.b16 %v69, %v68
  %v81 = vpack.c.b16 %v71, %v70
  %v82 = vpack.c.b16 %v73, %v72
  %v83 = vpack.c.b16 %v75, %v74
  %v108 = vunpack.c.l.b16 %v28
  %v109 = vunpack.c.l.b16 %v29
  %v110 = vunpack.c.l.b16 %v30
  %v111 = vunpack.c.l.b16 %v31
  %v112 = vunpack.c.l.b16 %v32
  %v113 = vunpack.c.l.b16 %v33
  %v114 = vunpack.c.l.b16 %v34
  %v115 = vunpack.c.l.b16 %v35
  %v116 = vunpack.c.l.b16 %v36
  %v117 = vunpack.c.l.b16 %v37
  %v118 = vunpack.c.l.b16 %v38
  %v119 = vunpack.c.l.b16 %v39
  %v120 = vunpack.c.l.b16 %v40
  %v121 = vunpack.c.l.b16 %v41
  %v122 = vunpack.c.l.b16 %v42
  %v123 = vunpack.c.l.b16 %v43
  %v124 = vpack.c.b16 %v109, %v108
  %v125 = vpack.c.b16 %v111, %v110
  %v126 = vpack.c.b16 %v113, %v112
  %v127 = vpack.c.b16 %v115, %v114
  %v128 = vpack.c.b16 %v117, %v116
  %v129 = vpack.c.b16 %v119, %v118
  %v130 = vpack.c.b16 %v121, %v120
  %v131 = vpack.c.b16 %v123, %v122
  %140 = vmatprep.subr.bf16.mxu0 0
  %141 = vmatpush1.bf16.msra.mxu0 %v131
  %142 = vmatprep.subr.bf16.mxu0 0
  %143 = vmatpush1.bf16.msra.mxu0 %v130
  %144 = vmatprep.subr.bf16.mxu0 0
  %145 = vmatpush1.bf16.msra.mxu0 %v129
  %146 = vmatprep.subr.bf16.mxu0 0
  %147 = vmatpush1.bf16.msra.mxu0 %v128
  %148 = vmatprep.subr.bf16.mxu0 0
  %149 = vmatpush1.bf16.msra.mxu0 %v127
  %150 = vmatprep.subr.bf16.mxu0 0
  %151 = vmatpush1.bf16.msra.mxu0 %v126
  %152 = vmatprep.subr.bf16.mxu0 0
  %153 = vmatpush1.bf16.msra.mxu0 %v125
  %154 = vmatprep.subr.bf16.mxu0 0
  %155 = vmatpush1.bf16.msra.mxu0 %v124
  %156 = vmatprep.subr.bf16.mxu0 0
  %157 = vmatpush2.bf16.msra.mxu0 0
  %158 = vmatprep.subr.bf16.mxu0 0
  %159 = vmatpush2.bf16.msra.mxu0 0
  %160 = vmatprep.subr.bf16.mxu0 0
  %161 = vmatpush2.bf16.msra.mxu0 0
  %162 = vmatprep.subr.bf16.mxu0 0
  %163 = vmatpush2.bf16.msra.mxu0 0
  %164 = vmatprep.subr.bf16.mxu0 0
  %165 = vmatpush2.bf16.msra.mxu0 0
  %166 = vmatprep.subr.bf16.mxu0 0
  %167 = vmatpush2.bf16.msra.mxu0 0
  %168 = vmatprep.subr.bf16.mxu0 0
  %169 = vmatpush2.bf16.msra.mxu0 0
  %170 = vmatprep.subr.bf16.mxu0 0
  %171 = vmatpush2.bf16.msra.mxu0 0
  %172 = vmatprep.mubr.bf16.mxu0 0
  %173 = vmatmul.mubr.bf16.gmra.mxu0 %v76
  %v174 = vpop.f32.mrf.mxu0
  %v175 = vadd.f32 0.0, %v174
  %v176 = vpop.f32.mrf.mxu0
  %v177 = vpop.f32.mrf.mxu0
  %v178 = vadd.f32 0.0, %v177
  %v179 = vpop.f32.mrf.mxu0
  %180 = vmatprep.mubr.bf16.mxu0 0
  %181 = vmatmul.mubr.bf16.gmra.mxu0 %v77
  %v182 = vpop.f32.mrf.mxu0
  %v183 = vadd.f32 0.0, %v182
  %v184 = vpop.f32.mrf.mxu0
  %v185 = vpop.f32.mrf.mxu0
  %v186 = vadd.f32 0.0, %v185
  %v187 = vpop.f32.mrf.mxu0
  %188 = vmatprep.mubr.bf16.mxu0 0
  %189 = vmatmul.mubr.bf16.gmra.mxu0 %v78
  %v190 = vpop.f32.mrf.mxu0
  %v191 = vadd.f32 0.0, %v190
  %v192 = vpop.f32.mrf.mxu0
  %v193 = vpop.f32.mrf.mxu0
  %v194 = vadd.f32 0.0, %v193
  %v195 = vpop.f32.mrf.mxu0
  %196 = vmatprep.mubr.bf16.mxu0 0
  %197 = vmatmul.mubr.bf16.gmra.mxu0 %v79
  %v198 = vpop.f32.mrf.mxu0
  %v199 = vadd.f32 0.0, %v198
  %v200 = vpop.f32.mrf.mxu0
  %v201 = vpop.f32.mrf.mxu0
  %v202 = vadd.f32 0.0, %v201
  %v203 = vpop.f32.mrf.mxu0
  %204 = vmatprep.mubr.bf16.mxu0 0
  %205 = vmatmul.mubr.bf16.gmra.mxu0 %v80
  %v206 = vpop.f32.mrf.mxu0
  %v207 = vadd.f32 0.0, %v206
  %v208 = vpop.f32.mrf.mxu0
  %v209 = vpop.f32.mrf.mxu0
  %v210 = vadd.f32 0.0, %v209
  %v211 = vpop.f32.mrf.mxu0
  %212 = vmatprep.mubr.bf16.mxu0 0
  %213 = vmatmul.mubr.bf16.gmra.mxu0 %v81
  %v214 = vpop.f32.mrf.mxu0
  %v215 = vadd.f32 0.0, %v214
  %v216 = vpop.f32.mrf.mxu0
  %v217 = vpop.f32.mrf.mxu0
  %v218 = vadd.f32 0.0, %v217
  %v219 = vpop.f32.mrf.mxu0
  %220 = vmatprep.mubr.bf16.mxu0 0
  %221 = vmatmul.mubr.bf16.gmra.mxu0 %v82
  %v222 = vpop.f32.mrf.mxu0
  %v223 = vadd.f32 0.0, %v222
  %v224 = vpop.f32.mrf.mxu0
  %v225 = vpop.f32.mrf.mxu0
  %v226 = vadd.f32 0.0, %v225
  %v227 = vpop.f32.mrf.mxu0
  %228 = vmatprep.mubr.bf16.mxu0 0
  %229 = vmatmul.mubr.bf16.gmra.mxu0 %v83
  %v230 = vpop.f32.mrf.mxu0
  %v231 = vadd.f32 0.0, %v230
  %v232 = vpop.f32.mrf.mxu0
  %v233 = vpop.f32.mrf.mxu0
  %v234 = vadd.f32 0.0, %v233
  %v235 = vpop.f32.mrf.mxu0
  %236 = vdwg.mxu0
  %v237 = vpack.c.bf16 %v178, %v175
  %v238 = vpack.c.bf16 %v186, %v183
  %v239 = vpack.c.bf16 %v194, %v191
  %v240 = vpack.c.bf16 %v202, %v199
  %v241 = vpack.c.bf16 %v210, %v207
  %v242 = vpack.c.bf16 %v218, %v215
  %v243 = vpack.c.bf16 %v226, %v223
  %v244 = vpack.c.bf16 %v234, %v231
  %v253 = vunpack.c.l.b16 %v237
  %v254 = vunpack.c.h.b16 %v237
  %v255 = vunpack.c.l.b16 %v238
  %v256 = vunpack.c.h.b16 %v238
  %v257 = vunpack.c.l.b16 %v239
  %v258 = vunpack.c.h.b16 %v239
  %v259 = vunpack.c.l.b16 %v240
  %v260 = vunpack.c.h.b16 %v240
  %v261 = vunpack.c.l.b16 %v241
  %v262 = vunpack.c.h.b16 %v241
  %v263 = vunpack.c.l.b16 %v242
  %v264 = vunpack.c.h.b16 %v242
  %v265 = vunpack.c.l.b16 %v243
  %v266 = vunpack.c.h.b16 %v243
  %v267 = vunpack.c.l.b16 %v244
  %v268 = vunpack.c.h.b16 %v244
  %v269 = vpack.c.b16 %v253, %v253
  %v270 = vpack.c.b16 %v254, %v254
  %v271 = vpack.c.b16 %v255, %v255
  %v272 = vpack.c.b16 %v256, %v256
  %v273 = vpack.c.b16 %v257, %v257
  %v274 = vpack.c.b16 %v258, %v258
  %v275 = vpack.c.b16 %v259, %v259
  %v276 = vpack.c.b16 %v260, %v260
  %v277 = vpack.c.b16 %v261, %v261
  %v278 = vpack.c.b16 %v262, %v262
  %v279 = vpack.c.b16 %v263, %v263
  %v280 = vpack.c.b16 %v264, %v264
  %v281 = vpack.c.b16 %v265, %v265
  %v282 = vpack.c.b16 %v266, %v266
  %v283 = vpack.c.b16 %v267, %v267
  %v284 = vpack.c.b16 %v268, %v268
  %301 = vst [vmem:[%s2] sm:$0xf] %v269
  %302 = vst [vmem:[%s2 + $0x4] sm:$0xf] %v270
  %303 = vst [vmem:[%s2 + $0x8] sm:$0xf] %v271
  %304 = vst [vmem:[%s2 + $0xc] sm:$0xf] %v272
  %305 = vst [vmem:[%s2 + $0x10] sm:$0xf] %v273
  %306 = vst [vmem:[%s2 + $0x14] sm:$0xf] %v274
  %307 = vst [vmem:[%s2 + $0x18] sm:$0xf] %v275
  %308 = vst [vmem:[%s2 + $0x1c] sm:$0xf] %v276
  %309 = vst [vmem:[%s2 + $0x20] sm:$0xf] %v277
  %310 = vst [vmem:[%s2 + $0x24] sm:$0xf] %v278
  %311 = vst [vmem:[%s2 + $0x28] sm:$0xf] %v279
  %312 = vst [vmem:[%s2 + $0x2c] sm:$0xf] %v280
  %313 = vst [vmem:[%s2 + $0x30] sm:$0xf] %v281
  %314 = vst [vmem:[%s2 + $0x34] sm:$0xf] %v282
  %315 = vst [vmem:[%s2 + $0x38] sm:$0xf] %v283
  %316 = vst [vmem:[%s2 + $0x3c] sm:$0xf] %v284
  // Predicated region
  $region10: #{gcn_layer.2} parent=0 // pred_check
    _
  $region11: #{gcn_layer.2} parent=0 // pred_check_branch
    %318 = sbr.rel (0) target = $region13
  $region12: #{gcn_layer.2} parent=0 // pred_region
    _
  $region13: #{gcn_layer.2} parent=0 // pred_fallthru
    _
  // Predicated region
  $region14: #{gcn_layer.2} parent=0 // pred_check
    _
  $region15: #{gcn_layer.2} parent=0 // pred_check_branch
    %320 = sbr.rel (0) target = $region17
  $region16: #{gcn_layer.2} parent=0 // pred_region
    _
  $region17: #{gcn_layer.2} parent=0 // pred_fallthru
    _

// kernel: gcn_layer.3
$region0: #{gcn_layer.3}
  #allocation0 [shape = 'u32[]', space=smem, size = 0x4, offset = 0x4, fixed_abs, tag = 'smem constant byte address 0x4 - core index']
  #allocation1 [shape = 'u32[144,128]{1,0:T(1,128)}', space=vmem, size = 0x12000, scoped, tag = 'internal scratch']
  %s0 = inlined_call_operand.vmem [shape: bf16[128,128], index: 0, kind: input, shape index: {}]
  %s1 = inlined_call_operand.vmem [shape: bf16[128,128], index: 1, kind: input, shape index: {}]
  %s2 = inlined_call_operand.vmem [shape: f32[128,1], index: 2, kind: input, shape index: {}]
  %s3 = inlined_call_operand.vmem [shape: f32[1,128], index: 3, kind: input, shape index: {}]
  %s4 = inlined_call_operand.vmem [shape: f32[128,128], index: 4, kind: output, shape index: {}]
  %s5 = sld [smem:[#allocation0]]
  $region34: #{gcn_layer.3} parent=0
    _
  %s7 = ssub.s32 1, %s5
  %s8 = scalar_select 0, %s7, %s5
  // Predicated region
  $region2: #{gcn_layer.3} parent=0 // pred_check
    _
  $region3: #{gcn_layer.3} parent=0 // pred_check_branch
    %10 = sbr.rel (0) target = $region5
  $region4: #{gcn_layer.3} parent=0 // pred_region
    _
  $region5: #{gcn_layer.3} parent=0 // pred_fallthru
    _
  // Predicated region
  $region6: #{gcn_layer.3} parent=0 // pred_check
    _
  $region7: #{gcn_layer.3} parent=0 // pred_check_branch
    %12 = sbr.rel (0) target = $region9
  $region8: #{gcn_layer.3} parent=0 // pred_region
    _
  $region9: #{gcn_layer.3} parent=0 // pred_fallthru
    _
  // Predicated region
  $region10: #{gcn_layer.3} parent=0 // pred_check
    _
  $region11: #{gcn_layer.3} parent=0 // pred_check_branch
    %14 = sbr.rel (0) target = $region13
  $region12: #{gcn_layer.3} parent=0 // pred_region
    _
  $region13: #{gcn_layer.3} parent=0 // pred_fallthru
    _
  // Predicated region
  $region14: #{gcn_layer.3} parent=0 // pred_check
    _
  $region15: #{gcn_layer.3} parent=0 // pred_check_branch
    %16 = sbr.rel (0) target = $region17
  $region16: #{gcn_layer.3} parent=0 // pred_region
    _
  $region17: #{gcn_layer.3} parent=0 // pred_fallthru
    _
  %p18 = scmp.eq.s32.totalorder 0, 0
  // Predicated region
  $region18: #{gcn_layer.3} parent=0 // pred_check
    %p19 = pneg %p18
  $region19: #{gcn_layer.3} parent=0 // pred_check_branch
    %21 = sbr.rel (%p19) target = $region21
  $region20: #{gcn_layer.3} parent=0 // pred_region
    %22 = vst [vmem:[%s4] sm:$0xff] 0.0
    %23 = vst [vmem:[%s4 + $0x8] sm:$0xff] 0.0
    %24 = vst [vmem:[%s4 + $0x10] sm:$0xff] 0.0
    %25 = vst [vmem:[%s4 + $0x18] sm:$0xff] 0.0
    %26 = vst [vmem:[%s4 + $0x20] sm:$0xff] 0.0
    %27 = vst [vmem:[%s4 + $0x28] sm:$0xff] 0.0
    %28 = vst [vmem:[%s4 + $0x30] sm:$0xff] 0.0
    %29 = vst [vmem:[%s4 + $0x38] sm:$0xff] 0.0
    %30 = vst [vmem:[%s4 + $0x40] sm:$0xff] 0.0
    %31 = vst [vmem:[%s4 + $0x48] sm:$0xff] 0.0
    %32 = vst [vmem:[%s4 + $0x50] sm:$0xff] 0.0
    %33 = vst [vmem:[%s4 + $0x58] sm:$0xff] 0.0
    %34 = vst [vmem:[%s4 + $0x60] sm:$0xff] 0.0
    %35 = vst [vmem:[%s4 + $0x68] sm:$0xff] 0.0
    %36 = vst [vmem:[%s4 + $0x70] sm:$0xff] 0.0
    %37 = vst [vmem:[%s4 + $0x78] sm:$0xff] 0.0
  $region21: #{gcn_layer.3} parent=0 // pred_fallthru
    _
  %s38 = smul.u32 0, 128
  %v39 = vld [vmem:[%s4] sm:$0xff]
  %v40 = vld [vmem:[%s4 + $0x8] sm:$0xff]
  %v41 = vld [vmem:[%s4 + $0x10] sm:$0xff]
  %v42 = vld [vmem:[%s4 + $0x18] sm:$0xff]
  %v43 = vld [vmem:[%s4 + $0x20] sm:$0xff]
  %v44 = vld [vmem:[%s4 + $0x28] sm:$0xff]
  %v45 = vld [vmem:[%s4 + $0x30] sm:$0xff]
  %v46 = vld [vmem:[%s4 + $0x38] sm:$0xff]
  %v47 = vld [vmem:[%s4 + $0x40] sm:$0xff]
  %v48 = vld [vmem:[%s4 + $0x48] sm:$0xff]
  %v49 = vld [vmem:[%s4 + $0x50] sm:$0xff]
  %v50 = vld [vmem:[%s4 + $0x58] sm:$0xff]
  %v51 = vld [vmem:[%s4 + $0x60] sm:$0xff]
  %v52 = vld [vmem:[%s4 + $0x68] sm:$0xff]
  %v53 = vld [vmem:[%s4 + $0x70] sm:$0xff]
  %v54 = vld [vmem:[%s4 + $0x78] sm:$0xff]
  %v55 = vld [vmem:[%s0] sm:$0xf]
  %v56 = vld [vmem:[%s0 + $0x4] sm:$0xf]
  %v57 = vld [vmem:[%s0 + $0x8] sm:$0xf]
  %v58 = vld [vmem:[%s0 + $0xc] sm:$0xf]
  %v59 = vld [vmem:[%s0 + $0x10] sm:$0xf]
  %v60 = vld [vmem:[%s0 + $0x14] sm:$0xf]
  %v61 = vld [vmem:[%s0 + $0x18] sm:$0xf]
  %v62 = vld [vmem:[%s0 + $0x1c] sm:$0xf]
  %v63 = vld [vmem:[%s0 + $0x20] sm:$0xf]
  %v64 = vld [vmem:[%s0 + $0x24] sm:$0xf]
  %v65 = vld [vmem:[%s0 + $0x28] sm:$0xf]
  %v66 = vld [vmem:[%s0 + $0x2c] sm:$0xf]
  %v67 = vld [vmem:[%s0 + $0x30] sm:$0xf]
  %v68 = vld [vmem:[%s0 + $0x34] sm:$0xf]
  %v69 = vld [vmem:[%s0 + $0x38] sm:$0xf]
  %v70 = vld [vmem:[%s0 + $0x3c] sm:$0xf]
  %s71 = sshra.s32 %s38, 3
  %s72 = sand.u32 %s38, 7
  %s73 = smul.addr %s71, 4
  %s74 = scalar_lea.vmem %s1, %s73
  %v75 = vld [vmem:[%s74] sm:$0xf]
  %v76 = vld [vmem:[%s74 + $0x4] sm:$0xf]
  %v77 = vld [vmem:[%s74 + $0x8] sm:$0xf]
  %v78 = vld [vmem:[%s74 + $0xc] sm:$0xf]
  %v79 = vld [vmem:[%s74 + $0x10] sm:$0xf]
  %v80 = vld [vmem:[%s74 + $0x14] sm:$0xf]
  %v81 = vld [vmem:[%s74 + $0x18] sm:$0xf]
  %v82 = vld [vmem:[%s74 + $0x1c] sm:$0xf]
  %v83 = vld [vmem:[%s74 + $0x20] sm:$0xf]
  %v84 = vld [vmem:[%s74 + $0x24] sm:$0xf]
  %v85 = vld [vmem:[%s74 + $0x28] sm:$0xf]
  %v86 = vld [vmem:[%s74 + $0x2c] sm:$0xf]
  %v87 = vld [vmem:[%s74 + $0x30] sm:$0xf]
  %v88 = vld [vmem:[%s74 + $0x34] sm:$0xf]
  %v89 = vld [vmem:[%s74 + $0x38] sm:$0xf]
  %v90 = vld [vmem:[%s74 + $0x3c] sm:$0xf]
  %v107 = vunpack.c.l.b16 %v55
  %v108 = vunpack.c.l.b16 %v56
  %v109 = vunpack.c.l.b16 %v57
  %v110 = vunpack.c.l.b16 %v58
  %v111 = vunpack.c.l.b16 %v59
  %v112 = vunpack.c.l.b16 %v60
  %v113 = vunpack.c.l.b16 %v61
  %v114 = vunpack.c.l.b16 %v62
  %v115 = vunpack.c.l.b16 %v63
  %v116 = vunpack.c.l.b16 %v64
  %v117 = vunpack.c.l.b16 %v65
  %v118 = vunpack.c.l.b16 %v66
  %v119 = vunpack.c.l.b16 %v67
  %v120 = vunpack.c.l.b16 %v68
  %v121 = vunpack.c.l.b16 %v69
  %v122 = vunpack.c.l.b16 %v70
  %v123 = vpack.c.b16 %v108, %v107
  %v124 = vpack.c.b16 %v110, %v109
  %v125 = vpack.c.b16 %v112, %v111
  %v126 = vpack.c.b16 %v114, %v113
  %v127 = vpack.c.b16 %v116, %v115
  %v128 = vpack.c.b16 %v118, %v117
  %v129 = vpack.c.b16 %v120, %v119
  %v130 = vpack.c.b16 %v122, %v121
  %v155 = vunpack.c.l.b16 %v75
  %v156 = vunpack.c.l.b16 %v76
  %v157 = vunpack.c.l.b16 %v77
  %v158 = vunpack.c.l.b16 %v78
  %v159 = vunpack.c.l.b16 %v79
  %v160 = vunpack.c.l.b16 %v80
  %v161 = vunpack.c.l.b16 %v81
  %v162 = vunpack.c.l.b16 %v82
  %v163 = vunpack.c.l.b16 %v83
  %v164 = vunpack.c.l.b16 %v84
  %v165 = vunpack.c.l.b16 %v85
  %v166 = vunpack.c.l.b16 %v86
  %v167 = vunpack.c.l.b16 %v87
  %v168 = vunpack.c.l.b16 %v88
  %v169 = vunpack.c.l.b16 %v89
  %v170 = vunpack.c.l.b16 %v90
  %v171 = vpack.c.b16 %v156, %v155
  %v172 = vpack.c.b16 %v158, %v157
  %v173 = vpack.c.b16 %v160, %v159
  %v174 = vpack.c.b16 %v162, %v161
  %v175 = vpack.c.b16 %v164, %v163
  %v176 = vpack.c.b16 %v166, %v165
  %v177 = vpack.c.b16 %v168, %v167
  %v178 = vpack.c.b16 %v170, %v169
  %187 = vmatprep.subr.bf16.mxu0 0
  %188 = vmatpush1.bf16.msra.mxu0 %v178
  %189 = vmatprep.subr.bf16.mxu0 0
  %190 = vmatpush1.bf16.msra.mxu0 %v177
  %191 = vmatprep.subr.bf16.mxu0 0
  %192 = vmatpush1.bf16.msra.mxu0 %v176
  %193 = vmatprep.subr.bf16.mxu0 0
  %194 = vmatpush1.bf16.msra.mxu0 %v175
  %195 = vmatprep.subr.bf16.mxu0 0
  %196 = vmatpush1.bf16.msra.mxu0 %v174
  %197 = vmatprep.subr.bf16.mxu0 0
  %198 = vmatpush1.bf16.msra.mxu0 %v173
  %199 = vmatprep.subr.bf16.mxu0 0
  %200 = vmatpush1.bf16.msra.mxu0 %v172
  %201 = vmatprep.subr.bf16.mxu0 0
  %202 = vmatpush1.bf16.msra.mxu0 %v171
  %203 = vmatprep.subr.bf16.mxu0 0
  %204 = vmatpush2.bf16.msra.mxu0 0
  %205 = vmatprep.subr.bf16.mxu0 0
  %206 = vmatpush2.bf16.msra.mxu0 0
  %207 = vmatprep.subr.bf16.mxu0 0
  %208 = vmatpush2.bf16.msra.mxu0 0
  %209 = vmatprep.subr.bf16.mxu0 0
  %210 = vmatpush2.bf16.msra.mxu0 0
  %211 = vmatprep.subr.bf16.mxu0 0
  %212 = vmatpush2.bf16.msra.mxu0 0
  %213 = vmatprep.subr.bf16.mxu0 0
  %214 = vmatpush2.bf16.msra.mxu0 0
  %215 = vmatprep.subr.bf16.mxu0 0
  %216 = vmatpush2.bf16.msra.mxu0 0
  %217 = vmatprep.subr.bf16.mxu0 0
  %218 = vmatpush2.bf16.msra.mxu0 0
  %219 = vmatprep.mubr.bf16.mxu0 0
  %220 = vmatmul.mubr.bf16.gmra.mxu0 %v123
  %v221 = vpop.f32.mrf.mxu0
  %v222 = vadd.f32 0.0, %v221
  %v223 = vpop.f32.mrf.mxu0
  %v224 = vpop.f32.mrf.mxu0
  %v225 = vadd.f32 0.0, %v224
  %v226 = vpop.f32.mrf.mxu0
  %227 = vmatprep.mubr.bf16.mxu0 0
  %228 = vmatmul.mubr.bf16.gmra.mxu0 %v124
  %v229 = vpop.f32.mrf.mxu0
  %v230 = vadd.f32 0.0, %v229
  %v231 = vpop.f32.mrf.mxu0
  %v232 = vpop.f32.mrf.mxu0
  %v233 = vadd.f32 0.0, %v232
  %v234 = vpop.f32.mrf.mxu0
  %235 = vmatprep.mubr.bf16.mxu0 0
  %236 = vmatmul.mubr.bf16.gmra.mxu0 %v125
  %v237 = vpop.f32.mrf.mxu0
  %v238 = vadd.f32 0.0, %v237
  %v239 = vpop.f32.mrf.mxu0
  %v240 = vpop.f32.mrf.mxu0
  %v241 = vadd.f32 0.0, %v240
  %v242 = vpop.f32.mrf.mxu0
  %243 = vmatprep.mubr.bf16.mxu0 0
  %244 = vmatmul.mubr.bf16.gmra.mxu0 %v126
  %v245 = vpop.f32.mrf.mxu0
  %v246 = vadd.f32 0.0, %v245
  %v247 = vpop.f32.mrf.mxu0
  %v248 = vpop.f32.mrf.mxu0
  %v249 = vadd.f32 0.0, %v248
  %v250 = vpop.f32.mrf.mxu0
  %251 = vmatprep.mubr.bf16.mxu0 0
  %252 = vmatmul.mubr.bf16.gmra.mxu0 %v127
  %v253 = vpop.f32.mrf.mxu0
  %v254 = vadd.f32 0.0, %v253
  %v255 = vpop.f32.mrf.mxu0
  %v256 = vpop.f32.mrf.mxu0
  %v257 = vadd.f32 0.0, %v256
  %v258 = vpop.f32.mrf.mxu0
  %259 = vmatprep.mubr.bf16.mxu0 0
  %260 = vmatmul.mubr.bf16.gmra.mxu0 %v128
  %v261 = vpop.f32.mrf.mxu0
  %v262 = vadd.f32 0.0, %v261
  %v263 = vpop.f32.mrf.mxu0
  %v264 = vpop.f32.mrf.mxu0
  %v265 = vadd.f32 0.0, %v264
  %v266 = vpop.f32.mrf.mxu0
  %267 = vmatprep.mubr.bf16.mxu0 0
  %268 = vmatmul.mubr.bf16.gmra.mxu0 %v129
  %v269 = vpop.f32.mrf.mxu0
  %v270 = vadd.f32 0.0, %v269
  %v271 = vpop.f32.mrf.mxu0
  %v272 = vpop.f32.mrf.mxu0
  %v273 = vadd.f32 0.0, %v272
  %v274 = vpop.f32.mrf.mxu0
  %275 = vmatprep.mubr.bf16.mxu0 0
  %276 = vmatmul.mubr.bf16.gmra.mxu0 %v130
  %v277 = vpop.f32.mrf.mxu0
  %v278 = vadd.f32 0.0, %v277
  %v279 = vpop.f32.mrf.mxu0
  %v280 = vpop.f32.mrf.mxu0
  %v281 = vadd.f32 0.0, %v280
  %v282 = vpop.f32.mrf.mxu0
  %283 = vdwg.mxu0
  %v284 = vadd.f32 %v39, %v222
  %v285 = vadd.f32 %v40, %v225
  %v286 = vadd.f32 %v41, %v230
  %v287 = vadd.f32 %v42, %v233
  %v288 = vadd.f32 %v43, %v238
  %v289 = vadd.f32 %v44, %v241
  %v290 = vadd.f32 %v45, %v246
  %v291 = vadd.f32 %v46, %v249
  %v292 = vadd.f32 %v47, %v254
  %v293 = vadd.f32 %v48, %v257
  %v294 = vadd.f32 %v49, %v262
  %v295 = vadd.f32 %v50, %v265
  %v296 = vadd.f32 %v51, %v270
  %v297 = vadd.f32 %v52, %v273
  %v298 = vadd.f32 %v53, %v278
  %v299 = vadd.f32 %v54, %v281
  %300 = vst [vmem:[%s4] sm:$0xff] %v284
  %301 = vst [vmem:[%s4 + $0x8] sm:$0xff] %v285
  %302 = vst [vmem:[%s4 + $0x10] sm:$0xff] %v286
  %303 = vst [vmem:[%s4 + $0x18] sm:$0xff] %v287
  %304 = vst [vmem:[%s4 + $0x20] sm:$0xff] %v288
  %305 = vst [vmem:[%s4 + $0x28] sm:$0xff] %v289
  %306 = vst [vmem:[%s4 + $0x30] sm:$0xff] %v290
  %307 = vst [vmem:[%s4 + $0x38] sm:$0xff] %v291
  %308 = vst [vmem:[%s4 + $0x40] sm:$0xff] %v292
  %309 = vst [vmem:[%s4 + $0x48] sm:$0xff] %v293
  %310 = vst [vmem:[%s4 + $0x50] sm:$0xff] %v294
  %311 = vst [vmem:[%s4 + $0x58] sm:$0xff] %v295
  %312 = vst [vmem:[%s4 + $0x60] sm:$0xff] %v296
  %313 = vst [vmem:[%s4 + $0x68] sm:$0xff] %v297
  %314 = vst [vmem:[%s4 + $0x70] sm:$0xff] %v298
  %315 = vst [vmem:[%s4 + $0x78] sm:$0xff] %v299
  // Predicated region
  $region22: #{gcn_layer.3} parent=0 // pred_check
    %p316 = pneg %p18
  $region23: #{gcn_layer.3} parent=0 // pred_check_branch
    %318 = sbr.rel (%p316) target = $region25
  $region24: #{gcn_layer.3} parent=0 // pred_region
    %v319 = vld [vmem:[%s4] sm:$0xff]
    %v320 = vld [vmem:[%s4 + $0x8] sm:$0xff]
    %v321 = vld [vmem:[%s4 + $0x10] sm:$0xff]
    %v322 = vld [vmem:[%s4 + $0x18] sm:$0xff]
    %v323 = vld [vmem:[%s4 + $0x20] sm:$0xff]
    %v324 = vld [vmem:[%s4 + $0x28] sm:$0xff]
    %v325 = vld [vmem:[%s4 + $0x30] sm:$0xff]
    %v326 = vld [vmem:[%s4 + $0x38] sm:$0xff]
    %v327 = vld [vmem:[%s4 + $0x40] sm:$0xff]
    %v328 = vld [vmem:[%s4 + $0x48] sm:$0xff]
    %v329 = vld [vmem:[%s4 + $0x50] sm:$0xff]
    %v330 = vld [vmem:[%s4 + $0x58] sm:$0xff]
    %v331 = vld [vmem:[%s4 + $0x60] sm:$0xff]
    %v332 = vld [vmem:[%s4 + $0x68] sm:$0xff]
    %v333 = vld [vmem:[%s4 + $0x70] sm:$0xff]
    %v334 = vld [vmem:[%s4 + $0x78] sm:$0xff]
    %v335 = vld [vmem:[%s2] sm:$0xff]
    %v336 = vld [vmem:[%s2 + $0x8] sm:$0xff]
    %v337 = vld [vmem:[%s2 + $0x10] sm:$0xff]
    %v338 = vld [vmem:[%s2 + $0x18] sm:$0xff]
    %v339 = vld [vmem:[%s2 + $0x20] sm:$0xff]
    %v340 = vld [vmem:[%s2 + $0x28] sm:$0xff]
    %v341 = vld [vmem:[%s2 + $0x30] sm:$0xff]
    %v342 = vld [vmem:[%s2 + $0x38] sm:$0xff]
    %v343 = vld [vmem:[%s2 + $0x40] sm:$0xff]
    %v344 = vld [vmem:[%s2 + $0x48] sm:$0xff]
    %v345 = vld [vmem:[%s2 + $0x50] sm:$0xff]
    %v346 = vld [vmem:[%s2 + $0x58] sm:$0xff]
    %v347 = vld [vmem:[%s2 + $0x60] sm:$0xff]
    %v348 = vld [vmem:[%s2 + $0x68] sm:$0xff]
    %v349 = vld [vmem:[%s2 + $0x70] sm:$0xff]
    %v350 = vld [vmem:[%s2 + $0x78] sm:$0xff]
    %352 = vset.pattern.permute.xlu0 0
    %353 = vperm.xlu0 %352, %v335
    %v354 = vpop.permute.xlu0 %353
    %357 = vset.pattern.permute.xlu0 0
    %358 = vperm.xlu0 %357, %v336
    %v359 = vpop.permute.xlu0 %358
    %362 = vset.pattern.permute.xlu0 0
    %363 = vperm.xlu0 %362, %v337
    %v364 = vpop.permute.xlu0 %363
    %367 = vset.pattern.permute.xlu0 0
    %368 = vperm.xlu0 %367, %v338
    %v369 = vpop.permute.xlu0 %368
    %372 = vset.pattern.permute.xlu0 0
    %373 = vperm.xlu0 %372, %v339
    %v374 = vpop.permute.xlu0 %373
    %377 = vset.pattern.permute.xlu0 0
    %378 = vperm.xlu0 %377, %v340
    %v379 = vpop.permute.xlu0 %378
    %382 = vset.pattern.permute.xlu0 0
    %383 = vperm.xlu0 %382, %v341
    %v384 = vpop.permute.xlu0 %383
    %387 = vset.pattern.permute.xlu0 0
    %388 = vperm.xlu0 %387, %v342
    %v389 = vpop.permute.xlu0 %388
    %392 = vset.pattern.permute.xlu0 0
    %393 = vperm.xlu0 %392, %v343
    %v394 = vpop.permute.xlu0 %393
    %397 = vset.pattern.permute.xlu0 0
    %398 = vperm.xlu0 %397, %v344
    %v399 = vpop.permute.xlu0 %398
    %402 = vset.pattern.permute.xlu0 0
    %403 = vperm.xlu0 %402, %v345
    %v404 = vpop.permute.xlu0 %403
    %407 = vset.pattern.permute.xlu0 0
    %408 = vperm.xlu0 %407, %v346
    %v409 = vpop.permute.xlu0 %408
    %412 = vset.pattern.permute.xlu0 0
    %413 = vperm.xlu0 %412, %v347
    %v414 = vpop.permute.xlu0 %413
    %417 = vset.pattern.permute.xlu0 0
    %418 = vperm.xlu0 %417, %v348
    %v419 = vpop.permute.xlu0 %418
    %422 = vset.pattern.permute.xlu0 0
    %423 = vperm.xlu0 %422, %v349
    %v424 = vpop.permute.xlu0 %423
    %427 = vset.pattern.permute.xlu0 0
    %428 = vperm.xlu0 %427, %v350
    %v429 = vpop.permute.xlu0 %428
    %v431 = vmul.f32 %v319, %v354
    %v432 = vmul.f32 %v320, %v359
    %v433 = vmul.f32 %v321, %v364
    %v434 = vmul.f32 %v322, %v369
    %v435 = vmul.f32 %v323, %v374
    %v436 = vmul.f32 %v324, %v379
    %v437 = vmul.f32 %v325, %v384
    %v438 = vmul.f32 %v326, %v389
    %v439 = vmul.f32 %v327, %v394
    %v440 = vmul.f32 %v328, %v399
    %v441 = vmul.f32 %v329, %v404
    %v442 = vmul.f32 %v330, %v409
    %v443 = vmul.f32 %v331, %v414
    %v444 = vmul.f32 %v332, %v419
    %v445 = vmul.f32 %v333, %v424
    %v446 = vmul.f32 %v334, %v429
    %v447 = vld [vmem:[%s3] sm:$0x1]
    %v449 = vlaneseq
    %v450 = vshrl.u32 %v449, 7
    %v451 = vsub.s32 0, %v450
    %v452 = vrot.slane %v447, %v451
    %v454 = vadd.f32 %v431, %v452
    %v455 = vadd.f32 %v432, %v452
    %v456 = vadd.f32 %v433, %v452
    %v457 = vadd.f32 %v434, %v452
    %v458 = vadd.f32 %v435, %v452
    %v459 = vadd.f32 %v436, %v452
    %v460 = vadd.f32 %v437, %v452
    %v461 = vadd.f32 %v438, %v452
    %v462 = vadd.f32 %v439, %v452
    %v463 = vadd.f32 %v440, %v452
    %v464 = vadd.f32 %v441, %v452
    %v465 = vadd.f32 %v442, %v452
    %v466 = vadd.f32 %v443, %v452
    %v467 = vadd.f32 %v444, %v452
    %v468 = vadd.f32 %v445, %v452
    %v469 = vadd.f32 %v446, %v452
    %v470 = vmax.f32 %v454, 0.0
    %v471 = vmax.f32 %v455, 0.0
    %v472 = vmax.f32 %v456, 0.0
    %v473 = vmax.f32 %v457, 0.0
    %v474 = vmax.f32 %v458, 0.0
    %v475 = vmax.f32 %v459, 0.0
    %v476 = vmax.f32 %v460, 0.0
    %v477 = vmax.f32 %v461, 0.0
    %v478 = vmax.f32 %v462, 0.0
    %v479 = vmax.f32 %v463, 0.0
    %v480 = vmax.f32 %v464, 0.0
    %v481 = vmax.f32 %v465, 0.0
    %v482 = vmax.f32 %v466, 0.0
    %v483 = vmax.f32 %v467, 0.0
    %v484 = vmax.f32 %v468, 0.0
    %v485 = vmax.f32 %v469, 0.0
    %486 = vst [vmem:[%s4] sm:$0xff] %v470
    %487 = vst [vmem:[%s4 + $0x8] sm:$0xff] %v471
    %488 = vst [vmem:[%s4 + $0x10] sm:$0xff] %v472
    %489 = vst [vmem:[%s4 + $0x18] sm:$0xff] %v473
    %490 = vst [vmem:[%s4 + $0x20] sm:$0xff] %v474
    %491 = vst [vmem:[%s4 + $0x28] sm:$0xff] %v475
    %492 = vst [vmem:[%s4 + $0x30] sm:$0xff] %v476
    %493 = vst [vmem:[%s4 + $0x38] sm:$0xff] %v477
    %494 = vst [vmem:[%s4 + $0x40] sm:$0xff] %v478
    %495 = vst [vmem:[%s4 + $0x48] sm:$0xff] %v479
    %496 = vst [vmem:[%s4 + $0x50] sm:$0xff] %v480
    %497 = vst [vmem:[%s4 + $0x58] sm:$0xff] %v481
    %498 = vst [vmem:[%s4 + $0x60] sm:$0xff] %v482
    %499 = vst [vmem:[%s4 + $0x68] sm:$0xff] %v483
    %500 = vst [vmem:[%s4 + $0x70] sm:$0xff] %v484
    %501 = vst [vmem:[%s4 + $0x78] sm:$0xff] %v485
  $region25: #{gcn_layer.3} parent=0 // pred_fallthru
    _
  // Predicated region
  $region26: #{gcn_layer.3} parent=0 // pred_check
    _
  $region27: #{gcn_layer.3} parent=0 // pred_check_branch
    %503 = sbr.rel (0) target = $region29
  $region28: #{gcn_layer.3} parent=0 // pred_region
    _
  $region29: #{gcn_layer.3} parent=0 // pred_fallthru
    _
  // Predicated region
  $region30: #{gcn_layer.3} parent=0 // pred_check
    _
  $region31: #{gcn_layer.3} parent=0 // pred_check_branch
    %505 = sbr.rel (0) target = $region33
  $region32: #{gcn_layer.3} parent=0 // pred_region
    _
  $region33: #{gcn_layer.3} parent=0 // pred_fallthru
    _

</llo_original>
